<compile_context>
chip_gen: v6e
topology: v6e:2x2x1
jax: 0.10.0
libtpu: 0.0.40
codegen_flags: <defaults>
</compile_context>

<pallas_src>
import math

import jax
import jax.numpy as jnp
from jax.experimental import pallas as pl
from jax.experimental.pallas import tpu as pltpu

EPS = 1e-5        # nn.BatchNorm1d default eps
F_IN = 136        # LTR feature count
F_PAD = 144       # padded feature count (multiple of 16 for bf16 sublane pairs)
H_PAD = 128       # padded hidden width (100 -> 128)

# Row offsets of each weight matrix inside the packed (528, 128) bf16 slab.
_W1_OFF, _W2_OFF, _W3_OFF, _W4_OFF, _W_END = 0, 144, 272, 400, 528
# Row indices inside the (16, 128) f32 vector slab.
_B1, _G1, _BE1, _B2, _G2, _BE2, _B3, _G3, _BE3, _B4 = range(10)


def _gelu(x):
    # Exact GELU (PyTorch nn.GELU() default, approximate='none').
    return 0.5 * x * (1.0 + jax.lax.erf(x * (1.0 / math.sqrt(2.0))))


def _mlp_kernel(x_ref, w_ref, v_ref, o_ref):
    # x_ref: (M, 144) bf16, w_ref: (528, 128) bf16, v_ref: (16, 128) f32,
    # o_ref: (M, 128) f32 (column 0 holds the scores).
    inv_m = 1.0 / x_ref.shape[0]

    def bn_gelu(h, g_row, be_row):
        # track_running_stats=False => batch statistics (biased variance),
        # computed in a single pass (sum + sum-of-squares).
        gamma = v_ref[g_row:g_row + 1, :]
        beta = v_ref[be_row:be_row + 1, :]
        s = jnp.sum(h, axis=0, keepdims=True)
        ss = jnp.sum(h * h, axis=0, keepdims=True)
        mean = s * inv_m
        var = jnp.maximum(ss * inv_m - mean * mean, 0.0)
        h = (h - mean) * (jax.lax.rsqrt(var + EPS) * gamma) + beta
        return _gelu(h)

    x = x_ref[...]  # bf16

    # Block 1: Linear -> (Dropout: identity in eval) -> BN -> GELU
    h = jnp.dot(x, w_ref[_W1_OFF:_W2_OFF, :],
                preferred_element_type=jnp.float32) + v_ref[_B1:_B1 + 1, :]
    h = bn_gelu(h, _G1, _BE1)

    # Block 2
    h = jnp.dot(h.astype(jnp.bfloat16), w_ref[_W2_OFF:_W3_OFF, :],
                preferred_element_type=jnp.float32) + v_ref[_B2:_B2 + 1, :]
    h = bn_gelu(h, _G2, _BE2)

    # Block 3
    h = jnp.dot(h.astype(jnp.bfloat16), w_ref[_W3_OFF:_W4_OFF, :],
                preferred_element_type=jnp.float32) + v_ref[_B3:_B3 + 1, :]
    h = bn_gelu(h, _G3, _BE3)

    # Output layer (folded into the 128-padded scheme) + final GELU (act_tl).
    h = jnp.dot(h.astype(jnp.bfloat16), w_ref[_W4_OFF:_W_END, :],
                preferred_element_type=jnp.float32) + v_ref[_B4:_B4 + 1, :]
    o_ref[...] = _gelu(h)


def init_params(key):
    """Deterministic params. Linear weights stored as (in, out) for direct dot.
    Mimics PyTorch default Linear init: U(-1/sqrt(fan_in), 1/sqrt(fan_in))."""
    dims = [F_IN, 100, 100, 100, 1]
    params = []
    keys = jax.random.split(key, 2 * (len(dims) - 1))
    for i in range(1, len(dims)):
        fan_in, fan_out = dims[i - 1], dims[i]
        bound = 1.0 / math.sqrt(fan_in)
        w = jax.random.uniform(keys[2 * (i - 1)], (fan_in, fan_out),
                               jnp.float32, -bound, bound)
        b = jax.random.uniform(keys[2 * (i - 1) + 1], (1, fan_out),
                               jnp.float32, -bound, bound)
        params.append(w)
        params.append(b)
        if i < len(dims) - 1:
            params.append(jnp.ones((1, fan_out), jnp.float32))    # gamma
            params.append(jnp.zeros((1, fan_out), jnp.float32))   # beta
    # order: w1,b1,g1,be1, w2,b2,g2,be2, w3,b3,g3,be3, w4,b4
    return params


def pack_params(params):
    """Pack the 14 parameter arrays into two pre-padded slabs."""
    (w1, b1, g1, be1, w2, b2, g2, be2, w3, b3, g3, be3, w4, b4) = params

    def pad_w(w, rows):
        out = jnp.zeros((rows, H_PAD), jnp.float32)
        return out.at[:w.shape[0], :w.shape[1]].set(w)

    w_slab = jnp.concatenate([
        pad_w(w1, F_PAD),      # rows   0:144
        pad_w(w2, H_PAD),      # rows 144:272
        pad_w(w3, H_PAD),      # rows 272:400
        pad_w(w4, H_PAD),      # rows 400:528
    ], axis=0).astype(jnp.bfloat16)

    def pad_v(v, fill=0.0):
        out = jnp.full((1, H_PAD), fill, jnp.float32)
        return out.at[:, :v.shape[1]].set(v)

    rows = [pad_v(b1), pad_v(g1, 1.0), pad_v(be1),
            pad_v(b2), pad_v(g2, 1.0), pad_v(be2),
            pad_v(b3), pad_v(g3, 1.0), pad_v(be3),
            pad_v(b4)]
    v_slab = jnp.concatenate(rows + [jnp.zeros((6, H_PAD), jnp.float32)], axis=0)
    return w_slab, v_slab


def lambdarank_forward(x, packed_params):
    """x: (B, L, 136) float32 -> scores (B, L, 1) float32."""
    w_slab, v_slab = packed_params
    B, L, F = x.shape
    M = B * L

    xm = x.reshape(M, F).astype(jnp.float32)
    xm = jnp.pad(xm, ((0, 0), (0, F_PAD - F))).astype(jnp.bfloat16)

    # Explicit scoped-VMEM sizing (default is 16/32 MiB depending on chip);
    # keep the request within the v7x 64 MiB physical VMEM.
    est = (xm.size * 2 + w_slab.size * 2 + v_slab.size * 4
           + 10 * M * H_PAD * 4 + (4 << 20))
    vmem_limit = int(min(48 << 20, max(32 << 20, est)))

    out = pl.pallas_call(
        _mlp_kernel,
        out_shape=jax.ShapeDtypeStruct((M, H_PAD), jnp.float32),
        in_specs=[pl.BlockSpec(memory_space=pltpu.MemorySpace.VMEM)] * 3,
        out_specs=pl.BlockSpec(memory_space=pltpu.MemorySpace.VMEM),
        compiler_params=pltpu.CompilerParams(vmem_limit_bytes=vmem_limit),
    )(xm, w_slab, v_slab)

    # Only column 0 carries the Linear(100->1) scores.
    return out[:, 0:1].reshape(B, L, 1)


def _reference_forward(x, params):
    """Pure-JAX reference with identical math (bf16 matmuls, f32 BN/GELU)."""
    (w1, b1, g1, be1, w2, b2, g2, be2, w3, b3, g3, be3, w4, b4) = params
    B, L, F = x.shape
    h = x.reshape(B * L, F).astype(jnp.float32)
    for (w, b, g, be) in [(w1, b1, g1, be1), (w2, b2, g2, be2), (w3, b3, g3, be3)]:
        h = jnp.dot(h.astype(jnp.bfloat16), w.astype(jnp.bfloat16),
                    preferred_element_type=jnp.float32) + b
        mean = jnp.mean(h, axis=0, keepdims=True)
        var = jnp.mean((h - mean) ** 2, axis=0, keepdims=True)
        h = (h - mean) * jax.lax.rsqrt(var + EPS) * g + be
        h = _gelu(h)
    h = jnp.dot(h.astype(jnp.bfloat16), w4.astype(jnp.bfloat16),
                preferred_element_type=jnp.float32) + b4
    h = _gelu(h)
    return h.reshape(B, L, 1)


if __name__ == "__main__":
    key = jax.random.PRNGKey(0)
    k_x, k_p = jax.random.split(key)

    B, L, F = 2, 8, F_IN  # 2 queries, 8 documents each, 136 LTR features
    x = jax.random.normal(k_x, (B, L, F), dtype=jnp.float32)
    params = init_params(k_p)
    packed = pack_params(params)

    # TODO(synk): Dropout(0.1) is implemented with eval semantics (identity);
    # training-mode PRNG masking is not part of this inference kernel.

    y = lambdarank_forward(x, packed)
    y = jax.block_until_ready(y)

    y_ref = _reference_forward(x, params)
    assert y.shape == (B, L, 1)
    assert jnp.allclose(y, y_ref, atol=5e-3, rtol=5e-3), "mismatch vs reference"

    print("KERNEL_OK")
</pallas_src>

<mosaic_0001>
module attributes {stable_mosaic.version = 11 : i64} {
  func.func @_mlp_kernel(%arg0: memref<16x144xbf16, #tpu.memory_space<vmem>>, %arg1: memref<528x128xbf16, #tpu.memory_space<vmem>>, %arg2: memref<16x128xf32, #tpu.memory_space<vmem>>, %arg3: memref<16x128xf32, #tpu.memory_space<vmem>>) attributes {dimension_semantics = [], scalar_prefetch = 0 : i64, scratch_operands = 0 : i64, tpu.core_type = #tpu.core_type<tc>} {
    %c0 = arith.constant 0 : index
    %c0_0 = arith.constant 0 : index
    %0 = vector.load %arg0[%c0, %c0_0] : memref<16x144xbf16, #tpu.memory_space<vmem>>, vector<16x144xbf16>
    %c0_1 = arith.constant 0 : index
    %c0_2 = arith.constant 0 : index
    %1 = vector.load %arg1[%c0_1, %c0_2] : memref<528x128xbf16, #tpu.memory_space<vmem>>, vector<144x128xbf16>
    %cst = arith.constant dense<0.000000e+00> : vector<16x128xf32>
    %2 = tpu.matmul %0, %1, %cst {dimension_numbers = #tpu.dot_dimension_numbers<[1], [0], [0], [1], [0, 0, 1, 1], [], []>} : vector<16x144xbf16>, vector<144x128xbf16>, vector<16x128xf32> -> vector<16x128xf32>
    %c0_3 = arith.constant 0 : index
    %c0_4 = arith.constant 0 : index
    %3 = vector.load %arg2[%c0_3, %c0_4] : memref<16x128xf32, #tpu.memory_space<vmem>>, vector<1x128xf32>
    %4 = vector.broadcast %3 : vector<1x128xf32> to vector<16x128xf32>
    %5 = arith.addf %2, %4 : vector<16x128xf32>
    %c1 = arith.constant 1 : index
    %c0_5 = arith.constant 0 : index
    %6 = vector.load %arg2[%c1, %c0_5] : memref<16x128xf32, #tpu.memory_space<vmem>>, vector<1x128xf32>
    %c2 = arith.constant 2 : index
    %c0_6 = arith.constant 0 : index
    %7 = vector.load %arg2[%c2, %c0_6] : memref<16x128xf32, #tpu.memory_space<vmem>>, vector<1x128xf32>
    %cst_7 = arith.constant dense<0.000000e+00> : vector<128xf32>
    %8 = vector.multi_reduction <add>, %5, %cst_7 [0] : vector<16x128xf32> to vector<128xf32>
    %9 = vector.shape_cast %8 : vector<128xf32> to vector<1x128xf32>
    %10 = arith.mulf %5, %5 : vector<16x128xf32>
    %cst_8 = arith.constant dense<0.000000e+00> : vector<128xf32>
    %11 = vector.multi_reduction <add>, %10, %cst_8 [0] : vector<16x128xf32> to vector<128xf32>
    %12 = vector.shape_cast %11 : vector<128xf32> to vector<1x128xf32>
    %cst_9 = arith.constant 6.250000e-02 : f32
    %13 = vector.broadcast %cst_9 : f32 to vector<1x128xf32>
    %14 = arith.mulf %9, %13 : vector<1x128xf32>
    %cst_10 = arith.constant 6.250000e-02 : f32
    %15 = vector.broadcast %cst_10 : f32 to vector<1x128xf32>
    %16 = arith.mulf %12, %15 : vector<1x128xf32>
    %17 = arith.mulf %14, %14 : vector<1x128xf32>
    %18 = arith.subf %16, %17 : vector<1x128xf32>
    %cst_11 = arith.constant 0.000000e+00 : f32
    %19 = vector.broadcast %cst_11 : f32 to vector<1x128xf32>
    %20 = arith.maximumf %18, %19 : vector<1x128xf32>
    %21 = vector.broadcast %14 : vector<1x128xf32> to vector<16x128xf32>
    %22 = arith.subf %5, %21 : vector<16x128xf32>
    %cst_12 = arith.constant 9.99999974E-6 : f32
    %23 = vector.broadcast %cst_12 : f32 to vector<1x128xf32>
    %24 = arith.addf %20, %23 : vector<1x128xf32>
    %25 = math.rsqrt %24 : vector<1x128xf32>
    %26 = arith.mulf %25, %6 : vector<1x128xf32>
    %27 = vector.broadcast %26 : vector<1x128xf32> to vector<16x128xf32>
    %28 = arith.mulf %22, %27 : vector<16x128xf32>
    %29 = vector.broadcast %7 : vector<1x128xf32> to vector<16x128xf32>
    %30 = arith.addf %28, %29 : vector<16x128xf32>
    %cst_13 = arith.constant 5.000000e-01 : f32
    %31 = vector.broadcast %cst_13 : f32 to vector<16x128xf32>
    %32 = arith.mulf %31, %30 : vector<16x128xf32>
    %cst_14 = arith.constant 0.707106769 : f32
    %33 = vector.broadcast %cst_14 : f32 to vector<16x128xf32>
    %34 = arith.mulf %30, %33 : vector<16x128xf32>
    %35 = math.erf %34 : vector<16x128xf32>
    %cst_15 = arith.constant 1.000000e+00 : f32
    %36 = vector.broadcast %cst_15 : f32 to vector<16x128xf32>
    %37 = arith.addf %36, %35 : vector<16x128xf32>
    %38 = arith.mulf %32, %37 : vector<16x128xf32>
    %39 = arith.truncf %38 : vector<16x128xf32> to vector<16x128xbf16>
    %c144 = arith.constant 144 : index
    %c0_16 = arith.constant 0 : index
    %40 = vector.load %arg1[%c144, %c0_16] : memref<528x128xbf16, #tpu.memory_space<vmem>>, vector<128x128xbf16>
    %cst_17 = arith.constant dense<0.000000e+00> : vector<16x128xf32>
    %41 = tpu.matmul %39, %40, %cst_17 {dimension_numbers = #tpu.dot_dimension_numbers<[1], [0], [0], [1], [0, 0, 1, 1], [], []>} : vector<16x128xbf16>, vector<128x128xbf16>, vector<16x128xf32> -> vector<16x128xf32>
    %c3 = arith.constant 3 : index
    %c0_18 = arith.constant 0 : index
    %42 = vector.load %arg2[%c3, %c0_18] : memref<16x128xf32, #tpu.memory_space<vmem>>, vector<1x128xf32>
    %43 = vector.broadcast %42 : vector<1x128xf32> to vector<16x128xf32>
    %44 = arith.addf %41, %43 : vector<16x128xf32>
    %c4 = arith.constant 4 : index
    %c0_19 = arith.constant 0 : index
    %45 = vector.load %arg2[%c4, %c0_19] : memref<16x128xf32, #tpu.memory_space<vmem>>, vector<1x128xf32>
    %c5 = arith.constant 5 : index
    %c0_20 = arith.constant 0 : index
    %46 = vector.load %arg2[%c5, %c0_20] : memref<16x128xf32, #tpu.memory_space<vmem>>, vector<1x128xf32>
    %cst_21 = arith.constant dense<0.000000e+00> : vector<128xf32>
    %47 = vector.multi_reduction <add>, %44, %cst_21 [0] : vector<16x128xf32> to vector<128xf32>
    %48 = vector.shape_cast %47 : vector<128xf32> to vector<1x128xf32>
    %49 = arith.mulf %44, %44 : vector<16x128xf32>
    %cst_22 = arith.constant dense<0.000000e+00> : vector<128xf32>
    %50 = vector.multi_reduction <add>, %49, %cst_22 [0] : vector<16x128xf32> to vector<128xf32>
    %51 = vector.shape_cast %50 : vector<128xf32> to vector<1x128xf32>
    %cst_23 = arith.constant 6.250000e-02 : f32
    %52 = vector.broadcast %cst_23 : f32 to vector<1x128xf32>
    %53 = arith.mulf %48, %52 : vector<1x128xf32>
    %cst_24 = arith.constant 6.250000e-02 : f32
    %54 = vector.broadcast %cst_24 : f32 to vector<1x128xf32>
    %55 = arith.mulf %51, %54 : vector<1x128xf32>
    %56 = arith.mulf %53, %53 : vector<1x128xf32>
    %57 = arith.subf %55, %56 : vector<1x128xf32>
    %cst_25 = arith.constant 0.000000e+00 : f32
    %58 = vector.broadcast %cst_25 : f32 to vector<1x128xf32>
    %59 = arith.maximumf %57, %58 : vector<1x128xf32>
    %60 = vector.broadcast %53 : vector<1x128xf32> to vector<16x128xf32>
    %61 = arith.subf %44, %60 : vector<16x128xf32>
    %cst_26 = arith.constant 9.99999974E-6 : f32
    %62 = vector.broadcast %cst_26 : f32 to vector<1x128xf32>
    %63 = arith.addf %59, %62 : vector<1x128xf32>
    %64 = math.rsqrt %63 : vector<1x128xf32>
    %65 = arith.mulf %64, %45 : vector<1x128xf32>
    %66 = vector.broadcast %65 : vector<1x128xf32> to vector<16x128xf32>
    %67 = arith.mulf %61, %66 : vector<16x128xf32>
    %68 = vector.broadcast %46 : vector<1x128xf32> to vector<16x128xf32>
    %69 = arith.addf %67, %68 : vector<16x128xf32>
    %cst_27 = arith.constant 5.000000e-01 : f32
    %70 = vector.broadcast %cst_27 : f32 to vector<16x128xf32>
    %71 = arith.mulf %70, %69 : vector<16x128xf32>
    %cst_28 = arith.constant 0.707106769 : f32
    %72 = vector.broadcast %cst_28 : f32 to vector<16x128xf32>
    %73 = arith.mulf %69, %72 : vector<16x128xf32>
    %74 = math.erf %73 : vector<16x128xf32>
    %cst_29 = arith.constant 1.000000e+00 : f32
    %75 = vector.broadcast %cst_29 : f32 to vector<16x128xf32>
    %76 = arith.addf %75, %74 : vector<16x128xf32>
    %77 = arith.mulf %71, %76 : vector<16x128xf32>
    %78 = arith.truncf %77 : vector<16x128xf32> to vector<16x128xbf16>
    %c272 = arith.constant 272 : index
    %c0_30 = arith.constant 0 : index
    %79 = vector.load %arg1[%c272, %c0_30] : memref<528x128xbf16, #tpu.memory_space<vmem>>, vector<128x128xbf16>
    %cst_31 = arith.constant dense<0.000000e+00> : vector<16x128xf32>
    %80 = tpu.matmul %78, %79, %cst_31 {dimension_numbers = #tpu.dot_dimension_numbers<[1], [0], [0], [1], [0, 0, 1, 1], [], []>} : vector<16x128xbf16>, vector<128x128xbf16>, vector<16x128xf32> -> vector<16x128xf32>
    %c6 = arith.constant 6 : index
    %c0_32 = arith.constant 0 : index
    %81 = vector.load %arg2[%c6, %c0_32] : memref<16x128xf32, #tpu.memory_space<vmem>>, vector<1x128xf32>
    %82 = vector.broadcast %81 : vector<1x128xf32> to vector<16x128xf32>
    %83 = arith.addf %80, %82 : vector<16x128xf32>
    %c7 = arith.constant 7 : index
    %c0_33 = arith.constant 0 : index
    %84 = vector.load %arg2[%c7, %c0_33] : memref<16x128xf32, #tpu.memory_space<vmem>>, vector<1x128xf32>
    %c8 = arith.constant 8 : index
    %c0_34 = arith.constant 0 : index
    %85 = vector.load %arg2[%c8, %c0_34] : memref<16x128xf32, #tpu.memory_space<vmem>>, vector<1x128xf32>
    %cst_35 = arith.constant dense<0.000000e+00> : vector<128xf32>
    %86 = vector.multi_reduction <add>, %83, %cst_35 [0] : vector<16x128xf32> to vector<128xf32>
    %87 = vector.shape_cast %86 : vector<128xf32> to vector<1x128xf32>
    %88 = arith.mulf %83, %83 : vector<16x128xf32>
    %cst_36 = arith.constant dense<0.000000e+00> : vector<128xf32>
    %89 = vector.multi_reduction <add>, %88, %cst_36 [0] : vector<16x128xf32> to vector<128xf32>
    %90 = vector.shape_cast %89 : vector<128xf32> to vector<1x128xf32>
    %cst_37 = arith.constant 6.250000e-02 : f32
    %91 = vector.broadcast %cst_37 : f32 to vector<1x128xf32>
    %92 = arith.mulf %87, %91 : vector<1x128xf32>
    %cst_38 = arith.constant 6.250000e-02 : f32
    %93 = vector.broadcast %cst_38 : f32 to vector<1x128xf32>
    %94 = arith.mulf %90, %93 : vector<1x128xf32>
    %95 = arith.mulf %92, %92 : vector<1x128xf32>
    %96 = arith.subf %94, %95 : vector<1x128xf32>
    %cst_39 = arith.constant 0.000000e+00 : f32
    %97 = vector.broadcast %cst_39 : f32 to vector<1x128xf32>
    %98 = arith.maximumf %96, %97 : vector<1x128xf32>
    %99 = vector.broadcast %92 : vector<1x128xf32> to vector<16x128xf32>
    %100 = arith.subf %83, %99 : vector<16x128xf32>
    %cst_40 = arith.constant 9.99999974E-6 : f32
    %101 = vector.broadcast %cst_40 : f32 to vector<1x128xf32>
    %102 = arith.addf %98, %101 : vector<1x128xf32>
    %103 = math.rsqrt %102 : vector<1x128xf32>
    %104 = arith.mulf %103, %84 : vector<1x128xf32>
    %105 = vector.broadcast %104 : vector<1x128xf32> to vector<16x128xf32>
    %106 = arith.mulf %100, %105 : vector<16x128xf32>
    %107 = vector.broadcast %85 : vector<1x128xf32> to vector<16x128xf32>
    %108 = arith.addf %106, %107 : vector<16x128xf32>
    %cst_41 = arith.constant 5.000000e-01 : f32
    %109 = vector.broadcast %cst_41 : f32 to vector<16x128xf32>
    %110 = arith.mulf %109, %108 : vector<16x128xf32>
    %cst_42 = arith.constant 0.707106769 : f32
    %111 = vector.broadcast %cst_42 : f32 to vector<16x128xf32>
    %112 = arith.mulf %108, %111 : vector<16x128xf32>
    %113 = math.erf %112 : vector<16x128xf32>
    %cst_43 = arith.constant 1.000000e+00 : f32
    %114 = vector.broadcast %cst_43 : f32 to vector<16x128xf32>
    %115 = arith.addf %114, %113 : vector<16x128xf32>
    %116 = arith.mulf %110, %115 : vector<16x128xf32>
    %117 = arith.truncf %116 : vector<16x128xf32> to vector<16x128xbf16>
    %c400 = arith.constant 400 : index
    %c0_44 = arith.constant 0 : index
    %118 = vector.load %arg1[%c400, %c0_44] : memref<528x128xbf16, #tpu.memory_space<vmem>>, vector<128x128xbf16>
    %cst_45 = arith.constant dense<0.000000e+00> : vector<16x128xf32>
    %119 = tpu.matmul %117, %118, %cst_45 {dimension_numbers = #tpu.dot_dimension_numbers<[1], [0], [0], [1], [0, 0, 1, 1], [], []>} : vector<16x128xbf16>, vector<128x128xbf16>, vector<16x128xf32> -> vector<16x128xf32>
    %c9 = arith.constant 9 : index
    %c0_46 = arith.constant 0 : index
    %120 = vector.load %arg2[%c9, %c0_46] : memref<16x128xf32, #tpu.memory_space<vmem>>, vector<1x128xf32>
    %121 = vector.broadcast %120 : vector<1x128xf32> to vector<16x128xf32>
    %122 = arith.addf %119, %121 : vector<16x128xf32>
    %cst_47 = arith.constant 5.000000e-01 : f32
    %123 = vector.broadcast %cst_47 : f32 to vector<16x128xf32>
    %124 = arith.mulf %123, %122 : vector<16x128xf32>
    %cst_48 = arith.constant 0.707106769 : f32
    %125 = vector.broadcast %cst_48 : f32 to vector<16x128xf32>
    %126 = arith.mulf %122, %125 : vector<16x128xf32>
    %127 = math.erf %126 : vector<16x128xf32>
    %cst_49 = arith.constant 1.000000e+00 : f32
    %128 = vector.broadcast %cst_49 : f32 to vector<16x128xf32>
    %129 = arith.addf %128, %127 : vector<16x128xf32>
    %130 = arith.mulf %124, %129 : vector<16x128xf32>
    %c0_50 = arith.constant 0 : index
    %c0_51 = arith.constant 0 : index
    %131 = vector.load %arg3[%c0_50, %c0_51] : memref<16x128xf32, #tpu.memory_space<vmem>>, vector<16x128xf32>
    tpu.vector_store %arg3[%c0_50, %c0_51], %130 {strides = array<i32>} : memref<16x128xf32, #tpu.memory_space<vmem>>, vector<16x128xf32>,
    return
  }
}

</mosaic_0001>

<llo_original>
// kernel: tpu_custom_call.1
$region0: #{tpu_custom_call.1}
  #allocation0 [shape = 'u32[]', space=smem, size = 0x4, offset = 0x4, fixed_abs, tag = 'smem constant byte address 0x4 - core index']
  #allocation1 [shape = 'u32[144,128]{1,0:T(1,128)}', space=vmem, size = 0x12000, scoped, tag = 'internal scratch']
  %s0 = inlined_call_operand.hbm [shape: bf16[16,144], index: 0, kind: input, shape index: {}]
  %s1 = inlined_call_operand.hbm [shape: bf16[528,128], index: 1, kind: input, shape index: {}]
  %s2 = inlined_call_operand.hbm [shape: f32[16,128], index: 2, kind: input, shape index: {}]
  %s3 = inlined_call_operand.hbm [shape: f32[16,128], index: 3, kind: output, shape index: {}]
  %s4 = sld [smem:[#allocation0]]
  $region34: #{tpu_custom_call.1} parent=0
    _
  %s6 = ssub.s32 1, %s4
  %s7 = scalar_select 0, %s6, %s4
  $region1: #{tpu_custom_call.1} parent=0
    #allocation2 [shape = 'u8[8192]{0}', space=vmem, size = 0x2000, scoped, tag = 'input window, operand 0, single buffered']
    #allocation3 [shape = 's32[1]{0}', space=sflag, size = 0x4, scoped, tag = 'scoped memory for tpu_custom_call.1']
    #allocation4 [shape = 's32[1]{0}', space=sflag, size = 0x4, scoped, tag = 'scoped memory for tpu_custom_call.1']
    #allocation5 [shape = 'u8[135168]{0}', space=vmem, size = 0x21000, scoped, tag = 'input window, operand 1, single buffered']
    #allocation6 [shape = 's32[1]{0}', space=sflag, size = 0x4, scoped, tag = 'scoped memory for tpu_custom_call.1']
    #allocation7 [shape = 'u8[8192]{0}', space=vmem, size = 0x2000, scoped, tag = 'input window, operand 2, single buffered']
    #allocation8 [shape = 'u8[8192]{0}', space=vmem, size = 0x2000, scoped, tag = 'output window, operand 0, single buffered']
    %8 = vsyncpa [#allocation3], 0
    %9 = vsyncpa [#allocation6], 0
    %10 = vsyncpa [#allocation4], 0
    // Predicated region
    $region2: #{tpu_custom_call.1} parent=1 // pred_check
      _
    $region3: #{tpu_custom_call.1} parent=1 // pred_check_branch
      %12 = sbr.rel (0) target = $region5
    $region4: #{tpu_custom_call.1} parent=1 // pred_region
      %s14 = ssub.s32 256, 256
      %15 = vsyncadd [#allocation3], %s14
      %s16 = sshll.u32 [#allocation2], 4
      %s17 = int_to_ptr.vmem [resolvable:$true] %s16
      %22 = dma.hbm_to_vmem [thread:$0]  %s0, 256, %s17, [#allocation3], 128, 128, 8
    $region5: #{tpu_custom_call.1} parent=1 // pred_fallthru
      _
    // Predicated region
    $region6: #{tpu_custom_call.1} parent=1 // pred_check
      _
    $region7: #{tpu_custom_call.1} parent=1 // pred_check_branch
      %24 = sbr.rel (0) target = $region9
    $region8: #{tpu_custom_call.1} parent=1 // pred_region
      %s26 = ssub.s32 4224, 4224
      %27 = vsyncadd [#allocation6], %s26
      %s28 = sshll.u32 [#allocation5], 4
      %s29 = int_to_ptr.vmem [resolvable:$true] %s28
      %34 = dma.hbm_to_vmem [thread:$0]  %s1, 4224, %s29, [#allocation6], 64, 64, 4
    $region9: #{tpu_custom_call.1} parent=1 // pred_fallthru
      _
    // Predicated region
    $region10: #{tpu_custom_call.1} parent=1 // pred_check
      _
    $region11: #{tpu_custom_call.1} parent=1 // pred_check_branch
      %36 = sbr.rel (0) target = $region13
    $region12: #{tpu_custom_call.1} parent=1 // pred_region
      %s38 = ssub.s32 256, 256
      %39 = vsyncadd [#allocation6], %s38
      %s40 = sshll.u32 [#allocation7], 4
      %s41 = int_to_ptr.vmem [resolvable:$true] %s40
      %46 = dma.hbm_to_vmem [thread:$0]  %s2, 256, %s41, [#allocation6], 128, 128, 8
    $region13: #{tpu_custom_call.1} parent=1 // pred_fallthru
      _
    // Predicated region
    $region14: #{tpu_custom_call.1} parent=1 // pred_check
      _
    $region15: #{tpu_custom_call.1} parent=1 // pred_check_branch
      %48 = sbr.rel (0) target = $region17
    $region16: #{tpu_custom_call.1} parent=1 // pred_region
      %49 = dma.done [#allocation3], 256
    $region17: #{tpu_custom_call.1} parent=1 // pred_fallthru
      _
    // Predicated region
    $region18: #{tpu_custom_call.1} parent=1 // pred_check
      _
    $region19: #{tpu_custom_call.1} parent=1 // pred_check_branch
      %51 = sbr.rel (0) target = $region21
    $region20: #{tpu_custom_call.1} parent=1 // pred_region
      %52 = dma.done [#allocation6], 4224
    $region21: #{tpu_custom_call.1} parent=1 // pred_fallthru
      _
    // Predicated region
    $region22: #{tpu_custom_call.1} parent=1 // pred_check
      _
    $region23: #{tpu_custom_call.1} parent=1 // pred_check_branch
      %54 = sbr.rel (0) target = $region25
    $region24: #{tpu_custom_call.1} parent=1 // pred_region
      %55 = dma.done [#allocation6], 256
    $region25: #{tpu_custom_call.1} parent=1 // pred_fallthru
      _
    %v57 = vld [vmem:[#allocation2] sm:$0xff]
    %v58 = vld [vmem:[#allocation2 + $0x8] sm:$0xff]
    %v59 = vld [vmem:[#allocation5] sm:$0xf]
    %v60 = vld [vmem:[#allocation5 + $0x4] sm:$0xf]
    %v61 = vld [vmem:[#allocation5 + $0x8] sm:$0xf]
    %v62 = vld [vmem:[#allocation5 + $0xc] sm:$0xf]
    %v63 = vld [vmem:[#allocation5 + $0x10] sm:$0xf]
    %v64 = vld [vmem:[#allocation5 + $0x14] sm:$0xf]
    %v65 = vld [vmem:[#allocation5 + $0x18] sm:$0xf]
    %v66 = vld [vmem:[#allocation5 + $0x1c] sm:$0xf]
    %v67 = vld [vmem:[#allocation5 + $0x20] sm:$0xf]
    %v68 = vld [vmem:[#allocation5 + $0x24] sm:$0xf]
    %v69 = vld [vmem:[#allocation5 + $0x28] sm:$0xf]
    %v70 = vld [vmem:[#allocation5 + $0x2c] sm:$0xf]
    %v71 = vld [vmem:[#allocation5 + $0x30] sm:$0xf]
    %v72 = vld [vmem:[#allocation5 + $0x34] sm:$0xf]
    %v73 = vld [vmem:[#allocation5 + $0x38] sm:$0xf]
    %v74 = vld [vmem:[#allocation5 + $0x3c] sm:$0xf]
    %v75 = vld [vmem:[#allocation5 + $0x40] sm:$0xf]
    %v76 = vld [vmem:[#allocation5 + $0x44] sm:$0xf]
    %v77 = vld [vmem:[#allocation7] sm:$0x1]
    %v78 = vlaneseq
    %v79 = vshrl.u32 %v78, 7
    %v80 = vsub.s32 0, %v79
    %v81 = vrot.slane %v77, %v80
    %v84 = vunpack.c.l.b16 %v57
    %v85 = vunpack.c.h.b16 %v57
    %v86 = vunpack.c.l.b16 %v58
    %v87 = vunpack.c.h.b16 %v58
    %v88 = vpack.c.b16 %v86, %v84
    %v89 = vpack.c.b16 %v87, %v85
    %v109 = vunpack.c.l.b16 %v59
    %v110 = vunpack.c.l.b16 %v60
    %v111 = vunpack.c.l.b16 %v61
    %v112 = vunpack.c.l.b16 %v62
    %v113 = vunpack.c.l.b16 %v63
    %v114 = vunpack.c.l.b16 %v64
    %v115 = vunpack.c.l.b16 %v65
    %v116 = vunpack.c.l.b16 %v66
    %v117 = vunpack.c.l.b16 %v67
    %v118 = vunpack.c.l.b16 %v68
    %v119 = vunpack.c.l.b16 %v69
    %v120 = vunpack.c.l.b16 %v70
    %v121 = vunpack.c.l.b16 %v71
    %v122 = vunpack.c.l.b16 %v72
    %v123 = vunpack.c.l.b16 %v73
    %v124 = vunpack.c.l.b16 %v74
    %v125 = vunpack.c.l.b16 %v75
    %v126 = vunpack.c.l.b16 %v76
    %v127 = vpack.c.b16 %v110, %v109
    %v128 = vpack.c.b16 %v112, %v111
    %v129 = vpack.c.b16 %v114, %v113
    %v130 = vpack.c.b16 %v116, %v115
    %v131 = vpack.c.b16 %v118, %v117
    %v132 = vpack.c.b16 %v120, %v119
    %v133 = vpack.c.b16 %v122, %v121
    %v134 = vpack.c.b16 %v124, %v123
    %v135 = vpack.c.b16 %v126, %v125
    %vm145 = vcmask 130048
    %v147 = vsel %vm145, %v89, 0
    %149 = vmatprep.subr.bf16.mxu0 0
    %150 = vmatpush1.bf16.msra.mxu0 %v134
    %151 = vmatprep.subr.bf16.mxu0 0
    %152 = vmatpush1.bf16.msra.mxu0 %v133
    %153 = vmatprep.subr.bf16.mxu0 0
    %154 = vmatpush1.bf16.msra.mxu0 %v132
    %155 = vmatprep.subr.bf16.mxu0 0
    %156 = vmatpush1.bf16.msra.mxu0 %v131
    %157 = vmatprep.subr.bf16.mxu0 0
    %158 = vmatpush1.bf16.msra.mxu0 %v130
    %159 = vmatprep.subr.bf16.mxu0 0
    %160 = vmatpush1.bf16.msra.mxu0 %v129
    %161 = vmatprep.subr.bf16.mxu0 0
    %162 = vmatpush1.bf16.msra.mxu0 %v128
    %163 = vmatprep.subr.bf16.mxu0 0
    %164 = vmatpush1.bf16.msra.mxu0 %v127
    %165 = vmatprep.subr.bf16.mxu0 0
    %166 = vmatpush2.bf16.msra.mxu0 0
    %167 = vmatprep.subr.bf16.mxu0 0
    %168 = vmatpush2.bf16.msra.mxu0 0
    %169 = vmatprep.subr.bf16.mxu0 0
    %170 = vmatpush2.bf16.msra.mxu0 0
    %171 = vmatprep.subr.bf16.mxu0 0
    %172 = vmatpush2.bf16.msra.mxu0 0
    %173 = vmatprep.subr.bf16.mxu0 0
    %174 = vmatpush2.bf16.msra.mxu0 0
    %175 = vmatprep.subr.bf16.mxu0 0
    %176 = vmatpush2.bf16.msra.mxu0 0
    %177 = vmatprep.subr.bf16.mxu0 0
    %178 = vmatpush2.bf16.msra.mxu0 0
    %179 = vmatprep.subr.bf16.mxu0 0
    %180 = vmatpush2.bf16.msra.mxu0 %v135
    %181 = vmatprep.mubr.bf16.mxu0 %v147
    %182 = vmatmul.mubr.bf16.gmra.mxu0 %v88
    %v183 = vpop.f32.mrf.mxu0
    %v184 = vadd.f32 %v81, %v183
    %v185 = vpop.f32.mrf.mxu0
    %v186 = vpop.f32.mrf.mxu0
    %v187 = vadd.f32 %v81, %v186
    %v188 = vpop.f32.mrf.mxu0
    %189 = vdwg.mxu0
    %v190 = vld [vmem:[#allocation7 + $0x1] sm:$0x1]
    %v191 = vld [vmem:[#allocation7 + $0x2] sm:$0x1]
    %v192 = vadd.f32 %v184, %v187
    %v193 = vrot.slane %v192, 4
    %v194 = vadd.f32 %v192, %v193
    %v195 = vrot.slane %v194, 2
    %v196 = vadd.f32 %v194, %v195
    %v197 = vrot.slane %v196, 1
    %v198 = vadd.f32 %v196, %v197
    %v199 = vmul.f32 %v184, %v184
    %v200 = vmul.f32 %v187, %v187
    %v201 = vadd.f32 %v199, %v200
    %v202 = vrot.slane %v201, 4
    %v203 = vadd.f32 %v201, %v202
    %v204 = vrot.slane %v203, 2
    %v205 = vadd.f32 %v203, %v204
    %v206 = vrot.slane %v205, 1
    %v207 = vadd.f32 %v205, %v206
    %v208 = vmul.f32 %v198, 0.0625
    %v209 = vmul.f32 %v207, 0.0625
    %v210 = vmul.f32 %v208, %v208
    %v211 = vsub.f32 %v209, %v210
    %v212 = vmax.f32 %v211, 0.0
    %v213 = vsub.f32 %v184, %v208
    %v214 = vsub.f32 %v187, %v208
    %v215 = vadd.f32 %v212, 1e-05
    %v216 = vrsqrt.pop %v215
    %v217 = vmul.f32 %v216, %v190
    %v218 = vlaneseq
    %v219 = vshrl.u32 %v218, 7
    %v220 = vsub.s32 0, %v219
    %v221 = vrot.slane %v217, %v220
    %v222 = vmul.f32 %v213, %v221
    %v223 = vmul.f32 %v214, %v221
    %v224 = vlaneseq
    %v225 = vshrl.u32 %v224, 7
    %v226 = vsub.s32 0, %v225
    %v227 = vrot.slane %v191, %v226
    %v228 = vadd.f32 %v222, %v227
    %v229 = vadd.f32 %v223, %v227
    %v230 = vmul.f32 %v228, 0.5
    %v231 = vmul.f32 %v229, 0.5
    %v232 = vmul.f32 %v228, 0.70710677
    %v233 = vmul.f32 %v229, 0.70710677
    %v234 = verf.f32.pop %v232
    %v235 = verf.f32.pop %v233
    %v236 = vadd.f32 %v234, 1.0
    %v237 = vadd.f32 %v235, 1.0
    %v238 = vmul.f32 %v230, %v236
    %v239 = vmul.f32 %v231, %v237
    %v240 = vpack.c.bf16 %v239, %v238
    %v241 = vld [vmem:[#allocation5 + $0x48] sm:$0xf]
    %v242 = vld [vmem:[#allocation5 + $0x4c] sm:$0xf]
    %v243 = vld [vmem:[#allocation5 + $0x50] sm:$0xf]
    %v244 = vld [vmem:[#allocation5 + $0x54] sm:$0xf]
    %v245 = vld [vmem:[#allocation5 + $0x58] sm:$0xf]
    %v246 = vld [vmem:[#allocation5 + $0x5c] sm:$0xf]
    %v247 = vld [vmem:[#allocation5 + $0x60] sm:$0xf]
    %v248 = vld [vmem:[#allocation5 + $0x64] sm:$0xf]
    %v249 = vld [vmem:[#allocation5 + $0x68] sm:$0xf]
    %v250 = vld [vmem:[#allocation5 + $0x6c] sm:$0xf]
    %v251 = vld [vmem:[#allocation5 + $0x70] sm:$0xf]
    %v252 = vld [vmem:[#allocation5 + $0x74] sm:$0xf]
    %v253 = vld [vmem:[#allocation5 + $0x78] sm:$0xf]
    %v254 = vld [vmem:[#allocation5 + $0x7c] sm:$0xf]
    %v255 = vld [vmem:[#allocation5 + $0x80] sm:$0xf]
    %v256 = vld [vmem:[#allocation5 + $0x84] sm:$0xf]
    %v257 = vld [vmem:[#allocation7 + $0x3] sm:$0x1]
    %v258 = vlaneseq
    %v259 = vshrl.u32 %v258, 7
    %v260 = vsub.s32 0, %v259
    %v261 = vrot.slane %v257, %v260
    %v278 = vunpack.c.l.b16 %v241
    %v279 = vunpack.c.l.b16 %v242
    %v280 = vunpack.c.l.b16 %v243
    %v281 = vunpack.c.l.b16 %v244
    %v282 = vunpack.c.l.b16 %v245
    %v283 = vunpack.c.l.b16 %v246
    %v284 = vunpack.c.l.b16 %v247
    %v285 = vunpack.c.l.b16 %v248
    %v286 = vunpack.c.l.b16 %v249
    %v287 = vunpack.c.l.b16 %v250
    %v288 = vunpack.c.l.b16 %v251
    %v289 = vunpack.c.l.b16 %v252
    %v290 = vunpack.c.l.b16 %v253
    %v291 = vunpack.c.l.b16 %v254
    %v292 = vunpack.c.l.b16 %v255
    %v293 = vunpack.c.l.b16 %v256
    %v294 = vpack.c.b16 %v279, %v278
    %v295 = vpack.c.b16 %v281, %v280
    %v296 = vpack.c.b16 %v283, %v282
    %v297 = vpack.c.b16 %v285, %v284
    %v298 = vpack.c.b16 %v287, %v286
    %v299 = vpack.c.b16 %v289, %v288
    %v300 = vpack.c.b16 %v291, %v290
    %v301 = vpack.c.b16 %v293, %v292
    %310 = vmatprep.subr.bf16.mxu0 0
    %311 = vmatpush1.bf16.msra.mxu0 %v301
    %312 = vmatprep.subr.bf16.mxu0 0
    %313 = vmatpush1.bf16.msra.mxu0 %v300
    %314 = vmatprep.subr.bf16.mxu0 0
    %315 = vmatpush1.bf16.msra.mxu0 %v299
    %316 = vmatprep.subr.bf16.mxu0 0
    %317 = vmatpush1.bf16.msra.mxu0 %v298
    %318 = vmatprep.subr.bf16.mxu0 0
    %319 = vmatpush1.bf16.msra.mxu0 %v297
    %320 = vmatprep.subr.bf16.mxu0 0
    %321 = vmatpush1.bf16.msra.mxu0 %v296
    %322 = vmatprep.subr.bf16.mxu0 0
    %323 = vmatpush1.bf16.msra.mxu0 %v295
    %324 = vmatprep.subr.bf16.mxu0 0
    %325 = vmatpush1.bf16.msra.mxu0 %v294
    %326 = vmatprep.subr.bf16.mxu0 0
    %327 = vmatpush2.bf16.msra.mxu0 0
    %328 = vmatprep.subr.bf16.mxu0 0
    %329 = vmatpush2.bf16.msra.mxu0 0
    %330 = vmatprep.subr.bf16.mxu0 0
    %331 = vmatpush2.bf16.msra.mxu0 0
    %332 = vmatprep.subr.bf16.mxu0 0
    %333 = vmatpush2.bf16.msra.mxu0 0
    %334 = vmatprep.subr.bf16.mxu0 0
    %335 = vmatpush2.bf16.msra.mxu0 0
    %336 = vmatprep.subr.bf16.mxu0 0
    %337 = vmatpush2.bf16.msra.mxu0 0
    %338 = vmatprep.subr.bf16.mxu0 0
    %339 = vmatpush2.bf16.msra.mxu0 0
    %340 = vmatprep.subr.bf16.mxu0 0
    %341 = vmatpush2.bf16.msra.mxu0 0
    %342 = vmatprep.mubr.bf16.mxu0 0
    %343 = vmatmul.mubr.bf16.gmra.mxu0 %v240
    %v344 = vpop.f32.mrf.mxu0
    %v345 = vadd.f32 %v261, %v344
    %v346 = vpop.f32.mrf.mxu0
    %v347 = vpop.f32.mrf.mxu0
    %v348 = vadd.f32 %v261, %v347
    %v349 = vpop.f32.mrf.mxu0
    %350 = vdwg.mxu0
    %v351 = vld [vmem:[#allocation7 + $0x4] sm:$0x1]
    %v352 = vld [vmem:[#allocation7 + $0x5] sm:$0x1]
    %v353 = vadd.f32 %v345, %v348
    %v354 = vrot.slane %v353, 4
    %v355 = vadd.f32 %v353, %v354
    %v356 = vrot.slane %v355, 2
    %v357 = vadd.f32 %v355, %v356
    %v358 = vrot.slane %v357, 1
    %v359 = vadd.f32 %v357, %v358
    %v360 = vmul.f32 %v345, %v345
    %v361 = vmul.f32 %v348, %v348
    %v362 = vadd.f32 %v360, %v361
    %v363 = vrot.slane %v362, 4
    %v364 = vadd.f32 %v362, %v363
    %v365 = vrot.slane %v364, 2
    %v366 = vadd.f32 %v364, %v365
    %v367 = vrot.slane %v366, 1
    %v368 = vadd.f32 %v366, %v367
    %v369 = vmul.f32 %v359, 0.0625
    %v370 = vmul.f32 %v368, 0.0625
    %v371 = vmul.f32 %v369, %v369
    %v372 = vsub.f32 %v370, %v371
    %v373 = vmax.f32 %v372, 0.0
    %v374 = vsub.f32 %v345, %v369
    %v375 = vsub.f32 %v348, %v369
    %v376 = vadd.f32 %v373, 1e-05
    %v377 = vrsqrt.pop %v376
    %v378 = vmul.f32 %v377, %v351
    %v379 = vlaneseq
    %v380 = vshrl.u32 %v379, 7
    %v381 = vsub.s32 0, %v380
    %v382 = vrot.slane %v378, %v381
    %v383 = vmul.f32 %v374, %v382
    %v384 = vmul.f32 %v375, %v382
    %v385 = vlaneseq
    %v386 = vshrl.u32 %v385, 7
    %v387 = vsub.s32 0, %v386
    %v388 = vrot.slane %v352, %v387
    %v389 = vadd.f32 %v383, %v388
    %v390 = vadd.f32 %v384, %v388
    %v391 = vmul.f32 %v389, 0.5
    %v392 = vmul.f32 %v390, 0.5
    %v393 = vmul.f32 %v389, 0.70710677
    %v394 = vmul.f32 %v390, 0.70710677
    %v395 = verf.f32.pop %v393
    %v396 = verf.f32.pop %v394
    %v397 = vadd.f32 %v395, 1.0
    %v398 = vadd.f32 %v396, 1.0
    %v399 = vmul.f32 %v391, %v397
    %v400 = vmul.f32 %v392, %v398
    %v401 = vpack.c.bf16 %v400, %v399
    %v402 = vld [vmem:[#allocation5 + $0x88] sm:$0xf]
    %v403 = vld [vmem:[#allocation5 + $0x8c] sm:$0xf]
    %v404 = vld [vmem:[#allocation5 + $0x90] sm:$0xf]
    %v405 = vld [vmem:[#allocation5 + $0x94] sm:$0xf]
    %v406 = vld [vmem:[#allocation5 + $0x98] sm:$0xf]
    %v407 = vld [vmem:[#allocation5 + $0x9c] sm:$0xf]
    %v408 = vld [vmem:[#allocation5 + $0xa0] sm:$0xf]
    %v409 = vld [vmem:[#allocation5 + $0xa4] sm:$0xf]
    %v410 = vld [vmem:[#allocation5 + $0xa8] sm:$0xf]
    %v411 = vld [vmem:[#allocation5 + $0xac] sm:$0xf]
    %v412 = vld [vmem:[#allocation5 + $0xb0] sm:$0xf]
    %v413 = vld [vmem:[#allocation5 + $0xb4] sm:$0xf]
    %v414 = vld [vmem:[#allocation5 + $0xb8] sm:$0xf]
    %v415 = vld [vmem:[#allocation5 + $0xbc] sm:$0xf]
    %v416 = vld [vmem:[#allocation5 + $0xc0] sm:$0xf]
    %v417 = vld [vmem:[#allocation5 + $0xc4] sm:$0xf]
    %v418 = vld [vmem:[#allocation7 + $0x6] sm:$0x1]
    %v419 = vlaneseq
    %v420 = vshrl.u32 %v419, 7
    %v421 = vsub.s32 0, %v420
    %v422 = vrot.slane %v418, %v421
    %v439 = vunpack.c.l.b16 %v402
    %v440 = vunpack.c.l.b16 %v403
    %v441 = vunpack.c.l.b16 %v404
    %v442 = vunpack.c.l.b16 %v405
    %v443 = vunpack.c.l.b16 %v406
    %v444 = vunpack.c.l.b16 %v407
    %v445 = vunpack.c.l.b16 %v408
    %v446 = vunpack.c.l.b16 %v409
    %v447 = vunpack.c.l.b16 %v410
    %v448 = vunpack.c.l.b16 %v411
    %v449 = vunpack.c.l.b16 %v412
    %v450 = vunpack.c.l.b16 %v413
    %v451 = vunpack.c.l.b16 %v414
    %v452 = vunpack.c.l.b16 %v415
    %v453 = vunpack.c.l.b16 %v416
    %v454 = vunpack.c.l.b16 %v417
    %v455 = vpack.c.b16 %v440, %v439
    %v456 = vpack.c.b16 %v442, %v441
    %v457 = vpack.c.b16 %v444, %v443
    %v458 = vpack.c.b16 %v446, %v445
    %v459 = vpack.c.b16 %v448, %v447
    %v460 = vpack.c.b16 %v450, %v449
    %v461 = vpack.c.b16 %v452, %v451
    %v462 = vpack.c.b16 %v454, %v453
    %471 = vmatprep.subr.bf16.mxu0 0
    %472 = vmatpush1.bf16.msra.mxu0 %v462
    %473 = vmatprep.subr.bf16.mxu0 0
    %474 = vmatpush1.bf16.msra.mxu0 %v461
    %475 = vmatprep.subr.bf16.mxu0 0
    %476 = vmatpush1.bf16.msra.mxu0 %v460
    %477 = vmatprep.subr.bf16.mxu0 0
    %478 = vmatpush1.bf16.msra.mxu0 %v459
    %479 = vmatprep.subr.bf16.mxu0 0
    %480 = vmatpush1.bf16.msra.mxu0 %v458
    %481 = vmatprep.subr.bf16.mxu0 0
    %482 = vmatpush1.bf16.msra.mxu0 %v457
    %483 = vmatprep.subr.bf16.mxu0 0
    %484 = vmatpush1.bf16.msra.mxu0 %v456
    %485 = vmatprep.subr.bf16.mxu0 0
    %486 = vmatpush1.bf16.msra.mxu0 %v455
    %487 = vmatprep.subr.bf16.mxu0 0
    %488 = vmatpush2.bf16.msra.mxu0 0
    %489 = vmatprep.subr.bf16.mxu0 0
    %490 = vmatpush2.bf16.msra.mxu0 0
    %491 = vmatprep.subr.bf16.mxu0 0
    %492 = vmatpush2.bf16.msra.mxu0 0
    %493 = vmatprep.subr.bf16.mxu0 0
    %494 = vmatpush2.bf16.msra.mxu0 0
    %495 = vmatprep.subr.bf16.mxu0 0
    %496 = vmatpush2.bf16.msra.mxu0 0
    %497 = vmatprep.subr.bf16.mxu0 0
    %498 = vmatpush2.bf16.msra.mxu0 0
    %499 = vmatprep.subr.bf16.mxu0 0
    %500 = vmatpush2.bf16.msra.mxu0 0
    %501 = vmatprep.subr.bf16.mxu0 0
    %502 = vmatpush2.bf16.msra.mxu0 0
    %503 = vmatprep.mubr.bf16.mxu0 0
    %504 = vmatmul.mubr.bf16.gmra.mxu0 %v401
    %v505 = vpop.f32.mrf.mxu0
    %v506 = vadd.f32 %v422, %v505
    %v507 = vpop.f32.mrf.mxu0
    %v508 = vpop.f32.mrf.mxu0
    %v509 = vadd.f32 %v422, %v508
    %v510 = vpop.f32.mrf.mxu0
    %511 = vdwg.mxu0
    %v512 = vld [vmem:[#allocation7 + $0x7] sm:$0x1]
    %v513 = vld [vmem:[#allocation7 + $0x8] sm:$0x1]
    %v514 = vadd.f32 %v506, %v509
    %v515 = vrot.slane %v514, 4
    %v516 = vadd.f32 %v514, %v515
    %v517 = vrot.slane %v516, 2
    %v518 = vadd.f32 %v516, %v517
    %v519 = vrot.slane %v518, 1
    %v520 = vadd.f32 %v518, %v519
    %v521 = vmul.f32 %v506, %v506
    %v522 = vmul.f32 %v509, %v509
    %v523 = vadd.f32 %v521, %v522
    %v524 = vrot.slane %v523, 4
    %v525 = vadd.f32 %v523, %v524
    %v526 = vrot.slane %v525, 2
    %v527 = vadd.f32 %v525, %v526
    %v528 = vrot.slane %v527, 1
    %v529 = vadd.f32 %v527, %v528
    %v530 = vmul.f32 %v520, 0.0625
    %v531 = vmul.f32 %v529, 0.0625
    %v532 = vmul.f32 %v530, %v530
    %v533 = vsub.f32 %v531, %v532
    %v534 = vmax.f32 %v533, 0.0
    %v535 = vsub.f32 %v506, %v530
    %v536 = vsub.f32 %v509, %v530
    %v537 = vadd.f32 %v534, 1e-05
    %v538 = vrsqrt.pop %v537
    %v539 = vmul.f32 %v538, %v512
    %v540 = vlaneseq
    %v541 = vshrl.u32 %v540, 7
    %v542 = vsub.s32 0, %v541
    %v543 = vrot.slane %v539, %v542
    %v544 = vmul.f32 %v535, %v543
    %v545 = vmul.f32 %v536, %v543
    %v546 = vlaneseq
    %v547 = vshrl.u32 %v546, 7
    %v548 = vsub.s32 0, %v547
    %v549 = vrot.slane %v513, %v548
    %v550 = vadd.f32 %v544, %v549
    %v551 = vadd.f32 %v545, %v549
    %v552 = vmul.f32 %v550, 0.5
    %v553 = vmul.f32 %v551, 0.5
    %v554 = vmul.f32 %v550, 0.70710677
    %v555 = vmul.f32 %v551, 0.70710677
    %v556 = verf.f32.pop %v554
    %v557 = verf.f32.pop %v555
    %v558 = vadd.f32 %v556, 1.0
    %v559 = vadd.f32 %v557, 1.0
    %v560 = vmul.f32 %v552, %v558
    %v561 = vmul.f32 %v553, %v559
    %v562 = vpack.c.bf16 %v561, %v560
    %v563 = vld [vmem:[#allocation5 + $0xc8] sm:$0xf]
    %v564 = vld [vmem:[#allocation5 + $0xcc] sm:$0xf]
    %v565 = vld [vmem:[#allocation5 + $0xd0] sm:$0xf]
    %v566 = vld [vmem:[#allocation5 + $0xd4] sm:$0xf]
    %v567 = vld [vmem:[#allocation5 + $0xd8] sm:$0xf]
    %v568 = vld [vmem:[#allocation5 + $0xdc] sm:$0xf]
    %v569 = vld [vmem:[#allocation5 + $0xe0] sm:$0xf]
    %v570 = vld [vmem:[#allocation5 + $0xe4] sm:$0xf]
    %v571 = vld [vmem:[#allocation5 + $0xe8] sm:$0xf]
    %v572 = vld [vmem:[#allocation5 + $0xec] sm:$0xf]
    %v573 = vld [vmem:[#allocation5 + $0xf0] sm:$0xf]
    %v574 = vld [vmem:[#allocation5 + $0xf4] sm:$0xf]
    %v575 = vld [vmem:[#allocation5 + $0xf8] sm:$0xf]
    %v576 = vld [vmem:[#allocation5 + $0xfc] sm:$0xf]
    %v577 = vld [vmem:[#allocation5 + $0x100] sm:$0xf]
    %v578 = vld [vmem:[#allocation5 + $0x104] sm:$0xf]
    %v579 = vld [vmem:[#allocation7 + $0x9] sm:$0x1]
    %v580 = vlaneseq
    %v581 = vshrl.u32 %v580, 7
    %v582 = vsub.s32 0, %v581
    %v583 = vrot.slane %v579, %v582
    %v600 = vunpack.c.l.b16 %v563
    %v601 = vunpack.c.l.b16 %v564
    %v602 = vunpack.c.l.b16 %v565
    %v603 = vunpack.c.l.b16 %v566
    %v604 = vunpack.c.l.b16 %v567
    %v605 = vunpack.c.l.b16 %v568
    %v606 = vunpack.c.l.b16 %v569
    %v607 = vunpack.c.l.b16 %v570
    %v608 = vunpack.c.l.b16 %v571
    %v609 = vunpack.c.l.b16 %v572
    %v610 = vunpack.c.l.b16 %v573
    %v611 = vunpack.c.l.b16 %v574
    %v612 = vunpack.c.l.b16 %v575
    %v613 = vunpack.c.l.b16 %v576
    %v614 = vunpack.c.l.b16 %v577
    %v615 = vunpack.c.l.b16 %v578
    %v616 = vpack.c.b16 %v601, %v600
    %v617 = vpack.c.b16 %v603, %v602
    %v618 = vpack.c.b16 %v605, %v604
    %v619 = vpack.c.b16 %v607, %v606
    %v620 = vpack.c.b16 %v609, %v608
    %v621 = vpack.c.b16 %v611, %v610
    %v622 = vpack.c.b16 %v613, %v612
    %v623 = vpack.c.b16 %v615, %v614
    %632 = vmatprep.subr.bf16.mxu0 0
    %633 = vmatpush1.bf16.msra.mxu0 %v623
    %634 = vmatprep.subr.bf16.mxu0 0
    %635 = vmatpush1.bf16.msra.mxu0 %v622
    %636 = vmatprep.subr.bf16.mxu0 0
    %637 = vmatpush1.bf16.msra.mxu0 %v621
    %638 = vmatprep.subr.bf16.mxu0 0
    %639 = vmatpush1.bf16.msra.mxu0 %v620
    %640 = vmatprep.subr.bf16.mxu0 0
    %641 = vmatpush1.bf16.msra.mxu0 %v619
    %642 = vmatprep.subr.bf16.mxu0 0
    %643 = vmatpush1.bf16.msra.mxu0 %v618
    %644 = vmatprep.subr.bf16.mxu0 0
    %645 = vmatpush1.bf16.msra.mxu0 %v617
    %646 = vmatprep.subr.bf16.mxu0 0
    %647 = vmatpush1.bf16.msra.mxu0 %v616
    %648 = vmatprep.subr.bf16.mxu0 0
    %649 = vmatpush2.bf16.msra.mxu0 0
    %650 = vmatprep.subr.bf16.mxu0 0
    %651 = vmatpush2.bf16.msra.mxu0 0
    %652 = vmatprep.subr.bf16.mxu0 0
    %653 = vmatpush2.bf16.msra.mxu0 0
    %654 = vmatprep.subr.bf16.mxu0 0
    %655 = vmatpush2.bf16.msra.mxu0 0
    %656 = vmatprep.subr.bf16.mxu0 0
    %657 = vmatpush2.bf16.msra.mxu0 0
    %658 = vmatprep.subr.bf16.mxu0 0
    %659 = vmatpush2.bf16.msra.mxu0 0
    %660 = vmatprep.subr.bf16.mxu0 0
    %661 = vmatpush2.bf16.msra.mxu0 0
    %662 = vmatprep.subr.bf16.mxu0 0
    %663 = vmatpush2.bf16.msra.mxu0 0
    %664 = vmatprep.mubr.bf16.mxu0 0
    %665 = vmatmul.mubr.bf16.gmra.mxu0 %v562
    %v666 = vpop.f32.mrf.mxu0
    %v667 = vadd.f32 %v583, %v666
    %v668 = vpop.f32.mrf.mxu0
    %v669 = vpop.f32.mrf.mxu0
    %v670 = vadd.f32 %v583, %v669
    %v671 = vpop.f32.mrf.mxu0
    %672 = vdwg.mxu0
    %v673 = vmul.f32 %v667, 0.5
    %v674 = vmul.f32 %v670, 0.5
    %v675 = vmul.f32 %v667, 0.70710677
    %v676 = vmul.f32 %v670, 0.70710677
    %v677 = verf.f32.pop %v675
    %v678 = verf.f32.pop %v676
    %v679 = vadd.f32 %v677, 1.0
    %v680 = vadd.f32 %v678, 1.0
    %v681 = vmul.f32 %v673, %v679
    %v682 = vmul.f32 %v674, %v680
    %683 = vst [vmem:[#allocation8] sm:$0xff] %v681
    %684 = vst [vmem:[#allocation8 + $0x8] sm:$0xff] %v682
    // Predicated region
    $region26: #{tpu_custom_call.1} parent=1 // pred_check
      _
    $region27: #{tpu_custom_call.1} parent=1 // pred_check_branch
      %686 = sbr.rel (0) target = $region29
    $region28: #{tpu_custom_call.1} parent=1 // pred_region
      %s688 = ssub.s32 256, 256
      %689 = vsyncadd [#allocation4], %s688
      %s690 = sshll.u32 [#allocation8], 4
      %s691 = int_to_ptr.vmem [resolvable:$true] %s690
      %696 = dma.vmem_to_hbm [thread:$0]  %s691, 256, %s3, [#allocation4], 128, 128, 8
    $region29: #{tpu_custom_call.1} parent=1 // pred_fallthru
      _
    // Predicated region
    $region30: #{tpu_custom_call.1} parent=1 // pred_check
      _
    $region31: #{tpu_custom_call.1} parent=1 // pred_check_branch
      %698 = sbr.rel (0) target = $region33
    $region32: #{tpu_custom_call.1} parent=1 // pred_region
      %699 = dma.done [#allocation4], 256
    $region33: #{tpu_custom_call.1} parent=1 // pred_fallthru
      _
    %700 = vsyncpa [#allocation3], 1
    %701 = vsyncpa [#allocation6], 1
    %702 = vsyncpa [#allocation4], 1

</llo_original>
